<compile_context>
chip_gen: v5e
topology: v5e:2x2
jax: 0.10.0
libtpu: 0.0.40
codegen_flags: <defaults>
</compile_context>

<pallas_src>
import functools

import jax
import jax.numpy as jnp
from jax import lax
from jax.experimental import pallas as pl
from jax.experimental.pallas import tpu as pltpu


def _residual_block_kernel(H, W, KH, PAD, Cin, Cout,
                           x_ref, r1_ref, t1_ref, r2_ref, t2_ref,
                           rs_ref, bs_ref, o_ref):
    # x_ref  : (H + 2*PAD, W*Cin)   bf16  H-padded input, (W, C) packed on lanes
    # r1_ref : (KH, W*Cin,  W*Cout) bf16  block-Toeplitz conv1 weights (BN1 folded)
    # r2_ref : (KH, W*Cout, W*Cout) bf16  block-Toeplitz conv2 weights (BN2 folded)
    # rs_ref : (W*Cin, W*Cout)      bf16  block-diagonal 1x1 shortcut weights
    # t1/t2/bs_ref : (1, W*Cout)    f32   per-channel shifts tiled across W
    # o_ref  : (H, W*Cout)          f32   lane-dense output tile
    WC = W * Cout

    x = x_ref[...]                                             # (H+2P, W*Cin)

    # conv1 + bias + BN1 (folded) -> ReLU : KH row-shifted Toeplitz matmuls.
    h1 = jnp.dot(x[0:H, :], r1_ref[0], preferred_element_type=jnp.float32)
    for kh in range(1, KH):
        h1 = h1 + jnp.dot(x[kh:kh + H, :], r1_ref[kh],
                          preferred_element_type=jnp.float32)
    h1 = jnp.maximum(h1 + t1_ref[...], 0.0)                    # (H, W*Cout) f32

    # Re-pad h1 along H only (W/taps padding is folded into r2); cast for the MXU.
    zrow = jnp.zeros((PAD, WC), jnp.float32)
    h1p = jnp.concatenate([zrow, h1, zrow], axis=0).astype(jnp.bfloat16)

    # conv2 + bias + BN2 (folded) -> ReLU.
    h2 = jnp.dot(h1p[0:H, :], r2_ref[0], preferred_element_type=jnp.float32)
    for kh in range(1, KH):
        h2 = h2 + jnp.dot(h1p[kh:kh + H, :], r2_ref[kh],
                          preferred_element_type=jnp.float32)
    h2 = jnp.maximum(h2 + t2_ref[...], 0.0)

    # Dropout(p=0.1): eval-mode identity.
    # TODO(synk): training-mode dropout would need pltpu.prng_seed/prng_random_bits.

    # 1x1-conv shortcut straight from the (unpadded rows of the) packed input:
    # no second activation input / duplicate DMA.
    sc = jnp.dot(x[PAD:PAD + H, :], rs_ref[...],
                 preferred_element_type=jnp.float32)

    o_ref[...] = (h2 + sc + bs_ref[...]).astype(o_ref.dtype)


def _conv_toeplitz(w_hwio, cin, width, shift):
    """Block-Toeplitz matrix turning a KW-tap conv along W into one matmul.

    Returns r of shape (KH, width*cin, width*cout) with
      r[kh, wi*cin + ci, wo*cout + co] = w_hwio[kh, wi + shift - wo, ci, co]
    and zero where the kw tap index falls outside [0, KW).  `shift` is the conv
    padding along W (the out-of-range columns are structural zeros, so the input
    never needs W-padding).
    """
    KH, KW, _, cout = w_hwio.shape
    q = jnp.arange(width * cin)
    m = jnp.arange(width * cout)
    wi, ci = q // cin, q % cin
    wo, co = m // cout, m % cout
    kw = wi[:, None] + shift - wo[None, :]
    valid = (kw >= 0) & (kw < KW)
    kw_safe = jnp.clip(kw, 0, KW - 1)
    r = w_hwio[:, kw_safe, ci[:, None], co[None, :]]           # (KH, Q, M)
    return jnp.where(valid[None], r, 0.0)


def residual_block_forward(x_nchw, params, kernel=3, pad=1, eps=1e-5):
    N, Cin, H, W = x_nchw.shape
    Cout = params['w1'].shape[0]
    KH = kernel
    Hp = H + 2 * pad

    # NCHW -> NHWC, pad H only, pack (W, C) onto the lane axis, cast for the MXU.
    x = jnp.transpose(x_nchw, (0, 2, 3, 1)).astype(jnp.float32)
    xh = jnp.pad(x, ((0, 0), (pad, pad), (0, 0), (0, 0)))
    xh = xh.reshape(N, Hp, W * Cin).astype(jnp.bfloat16)

    # Fold eval-mode BatchNorm + conv bias:
    #   bn(conv(x) + b) = conv_{w*s}(x) + (b*s + beta - mean*s),  s = gamma/sqrt(var+eps)
    def fold(gamma, beta, mean, var):
        s = gamma / jnp.sqrt(var + eps)
        return s, beta - mean * s

    s1, t1 = fold(params['bn1_gamma'], params['bn1_beta'],
                  params['bn1_mean'], params['bn1_var'])
    s2, t2 = fold(params['bn2_gamma'], params['bn2_beta'],
                  params['bn2_mean'], params['bn2_var'])
    w1 = jnp.transpose(params['w1'], (2, 3, 1, 0)) * s1        # OIHW -> HWIO, BN-scaled
    w2 = jnp.transpose(params['w2'], (2, 3, 1, 0)) * s2
    ws = jnp.transpose(params['ws'], (2, 3, 1, 0))             # (1, 1, Cin, Cout)
    t1 = params['b1'] * s1 + t1
    t2 = params['b2'] * s2 + t2

    r1 = _conv_toeplitz(w1, Cin, W, pad).astype(jnp.bfloat16)    # (KH, W*Cin,  W*Cout)
    r2 = _conv_toeplitz(w2, Cout, W, pad).astype(jnp.bfloat16)   # (KH, W*Cout, W*Cout)
    rs = _conv_toeplitz(ws, Cin, W, 0)[0].astype(jnp.bfloat16)   # (W*Cin, W*Cout)

    tile = lambda v: jnp.tile(v.reshape(1, Cout).astype(jnp.float32), (1, W))

    kernel_fn = functools.partial(_residual_block_kernel, H, W, KH, pad, Cin, Cout)

    out = pl.pallas_call(
        kernel_fn,
        out_shape=jax.ShapeDtypeStruct((N, H, W * Cout), jnp.float32),
        grid_spec=pltpu.PrefetchScalarGridSpec(
            num_scalar_prefetch=0,
            grid=(N,),
            in_specs=[
                pl.BlockSpec((None, Hp, W * Cin), lambda n: (n, 0, 0)),
                pl.BlockSpec((KH, W * Cin, W * Cout), lambda n: (0, 0, 0)),
                pl.BlockSpec((1, W * Cout), lambda n: (0, 0)),
                pl.BlockSpec((KH, W * Cout, W * Cout), lambda n: (0, 0, 0)),
                pl.BlockSpec((1, W * Cout), lambda n: (0, 0)),
                pl.BlockSpec((W * Cin, W * Cout), lambda n: (0, 0)),
                pl.BlockSpec((1, W * Cout), lambda n: (0, 0)),
            ],
            out_specs=pl.BlockSpec((None, H, W * Cout), lambda n: (n, 0, 0)),
        ),
        compiler_params=pltpu.CompilerParams(
            dimension_semantics=("parallel",)),     # v7x: both TCs split the batch
    )(xh, r1, tile(t1), r2, tile(t2), rs, tile(params['bs']))

    return jnp.transpose(out.reshape(N, H, W, Cout), (0, 3, 1, 2))   # back to NCHW


def residual_block_reference(x_nchw, params, pad=1, eps=1e-5):
    """Precision-matched reference: bf16 MXU operands, f32 accumulation/epilogue."""
    x = jnp.transpose(x_nchw, (0, 2, 3, 1)).astype(jnp.float32)

    def fold(gamma, beta, mean, var):
        s = gamma / jnp.sqrt(var + eps)
        return s, beta - mean * s

    s1, t1 = fold(params['bn1_gamma'], params['bn1_beta'],
                  params['bn1_mean'], params['bn1_var'])
    s2, t2 = fold(params['bn2_gamma'], params['bn2_beta'],
                  params['bn2_mean'], params['bn2_var'])
    w1 = jnp.transpose(params['w1'], (2, 3, 1, 0)) * s1
    w2 = jnp.transpose(params['w2'], (2, 3, 1, 0)) * s2
    ws = jnp.transpose(params['ws'], (2, 3, 1, 0))
    t1 = params['b1'] * s1 + t1
    t2 = params['b2'] * s2 + t2

    def conv(a, w, p):
        return lax.conv_general_dilated(
            a.astype(jnp.bfloat16), w.astype(jnp.bfloat16), (1, 1),
            [(p, p), (p, p)], dimension_numbers=('NHWC', 'HWIO', 'NHWC'),
            preferred_element_type=jnp.float32)

    h = jnp.maximum(conv(x, w1, pad) + t1, 0.0)
    h = jnp.maximum(conv(h, w2, pad) + t2, 0.0)
    out = h + conv(x, ws, 0) + params['bs']
    return jnp.transpose(out, (0, 3, 1, 2))


if __name__ == "__main__":
    N, Cin, Cout, H, W = 2, 4, 8, 16, 16
    K, PAD = 3, 1

    keys = jax.random.split(jax.random.PRNGKey(0), 13)
    params = {
        'w1': 0.1 * jax.random.normal(keys[0], (Cout, Cin, K, K), jnp.float32),
        'b1': 0.1 * jax.random.normal(keys[1], (Cout,), jnp.float32),
        'w2': 0.1 * jax.random.normal(keys[2], (Cout, Cout, K, K), jnp.float32),
        'b2': 0.1 * jax.random.normal(keys[3], (Cout,), jnp.float32),
        'ws': 0.1 * jax.random.normal(keys[4], (Cout, Cin, 1, 1), jnp.float32),
        'bs': 0.1 * jax.random.normal(keys[5], (Cout,), jnp.float32),
        'bn1_gamma': 1.0 + 0.1 * jax.random.normal(keys[6], (Cout,), jnp.float32),
        'bn1_beta': 0.1 * jax.random.normal(keys[7], (Cout,), jnp.float32),
        'bn1_mean': 0.1 * jax.random.normal(keys[8], (Cout,), jnp.float32),
        'bn1_var': jax.random.uniform(keys[9], (Cout,), jnp.float32, 0.5, 1.5),
        'bn2_gamma': 1.0 + 0.1 * jax.random.normal(keys[10], (Cout,), jnp.float32),
        'bn2_beta': 0.1 * jax.random.normal(keys[11], (Cout,), jnp.float32),
        'bn2_mean': jnp.zeros((Cout,), jnp.float32),
        'bn2_var': jnp.ones((Cout,), jnp.float32),
    }
    x = jax.random.normal(keys[12], (N, Cin, H, W), jnp.float32)

    out = residual_block_forward(x, params, kernel=K, pad=PAD)
    out = jax.block_until_ready(out)

    ref = residual_block_reference(x, params, pad=PAD)
    err = float(jnp.max(jnp.abs(out - ref)))
    assert out.shape == (N, Cout, H, W)
    assert err < 1e-2, f"mismatch vs reference: {err}"
    print("KERNEL_OK")
</pallas_src>

<mosaic_0001>
module attributes {stable_mosaic.version = 11 : i64} {
  func.func @_residual_block_kernel(%arg0: i32, %arg1: memref<1x18x64xbf16, #tpu.memory_space<vmem>>, %arg2: memref<3x64x128xbf16, #tpu.memory_space<vmem>>, %arg3: memref<1x128xf32, #tpu.memory_space<vmem>>, %arg4: memref<3x128x128xbf16, #tpu.memory_space<vmem>>, %arg5: memref<1x128xf32, #tpu.memory_space<vmem>>, %arg6: memref<64x128xbf16, #tpu.memory_space<vmem>>, %arg7: memref<1x128xf32, #tpu.memory_space<vmem>>, %arg8: memref<1x16x128xf32, #tpu.memory_space<vmem>>) attributes {dimension_semantics = [#tpu.dimension_semantics<parallel>], iteration_bounds = array<i64: 2>, scalar_prefetch = 0 : i64, scratch_operands = 0 : i64, tpu.core_type = #tpu.core_type<tc>, window_params = [{transform_indices = @transform_0, window_bounds = array<i64: 1, 18, 64>}, {pipeline_mode = #tpu.pipeline_mode<synchronous>, transform_indices = @transform_1, window_bounds = array<i64: 3, 64, 128>}, {pipeline_mode = #tpu.pipeline_mode<synchronous>, transform_indices = @transform_2, window_bounds = array<i64: 1, 128>}, {pipeline_mode = #tpu.pipeline_mode<synchronous>, transform_indices = @transform_3, window_bounds = array<i64: 3, 128, 128>}, {pipeline_mode = #tpu.pipeline_mode<synchronous>, transform_indices = @transform_4, window_bounds = array<i64: 1, 128>}, {pipeline_mode = #tpu.pipeline_mode<synchronous>, transform_indices = @transform_5, window_bounds = array<i64: 64, 128>}, {pipeline_mode = #tpu.pipeline_mode<synchronous>, transform_indices = @transform_6, window_bounds = array<i64: 1, 128>}, {transform_indices = @transform_7, window_bounds = array<i64: 1, 16, 128>}]} {
    %c0 = arith.constant 0 : index
    %c0_0 = arith.constant 0 : index
    %c0_1 = arith.constant 0 : index
    %0 = vector.load %arg1[%c0, %c0_0, %c0_1] : memref<1x18x64xbf16, #tpu.memory_space<vmem>>, vector<1x18x64xbf16>
    %1 = vector.shape_cast %0 : vector<1x18x64xbf16> to vector<18x64xbf16>
    %2 = vector.extract_strided_slice %1 {offsets = [0, 0], sizes = [16, 64], strides = [1, 1]} : vector<18x64xbf16> to vector<16x64xbf16>
    %c0_2 = arith.constant 0 : index
    %c0_3 = arith.constant 0 : index
    %c0_4 = arith.constant 0 : index
    %3 = vector.load %arg2[%c0_2, %c0_3, %c0_4] : memref<3x64x128xbf16, #tpu.memory_space<vmem>>, vector<1x64x128xbf16>
    %4 = vector.shape_cast %3 : vector<1x64x128xbf16> to vector<64x128xbf16>
    %cst = arith.constant dense<0.000000e+00> : vector<16x128xf32>
    %5 = tpu.matmul %2, %4, %cst {dimension_numbers = #tpu.dot_dimension_numbers<[1], [0], [0], [1], [0, 0, 1, 1], [], []>} : vector<16x64xbf16>, vector<64x128xbf16>, vector<16x128xf32> -> vector<16x128xf32>
    %6 = vector.extract_strided_slice %1 {offsets = [1, 0], sizes = [16, 64], strides = [1, 1]} : vector<18x64xbf16> to vector<16x64xbf16>
    %c1 = arith.constant 1 : index
    %c0_5 = arith.constant 0 : index
    %c0_6 = arith.constant 0 : index
    %7 = vector.load %arg2[%c1, %c0_5, %c0_6] : memref<3x64x128xbf16, #tpu.memory_space<vmem>>, vector<1x64x128xbf16>
    %8 = vector.shape_cast %7 : vector<1x64x128xbf16> to vector<64x128xbf16>
    %cst_7 = arith.constant dense<0.000000e+00> : vector<16x128xf32>
    %9 = tpu.matmul %6, %8, %cst_7 {dimension_numbers = #tpu.dot_dimension_numbers<[1], [0], [0], [1], [0, 0, 1, 1], [], []>} : vector<16x64xbf16>, vector<64x128xbf16>, vector<16x128xf32> -> vector<16x128xf32>
    %10 = arith.addf %5, %9 : vector<16x128xf32>
    %11 = vector.extract_strided_slice %1 {offsets = [2, 0], sizes = [16, 64], strides = [1, 1]} : vector<18x64xbf16> to vector<16x64xbf16>
    %c2 = arith.constant 2 : index
    %c0_8 = arith.constant 0 : index
    %c0_9 = arith.constant 0 : index
    %12 = vector.load %arg2[%c2, %c0_8, %c0_9] : memref<3x64x128xbf16, #tpu.memory_space<vmem>>, vector<1x64x128xbf16>
    %13 = vector.shape_cast %12 : vector<1x64x128xbf16> to vector<64x128xbf16>
    %cst_10 = arith.constant dense<0.000000e+00> : vector<16x128xf32>
    %14 = tpu.matmul %11, %13, %cst_10 {dimension_numbers = #tpu.dot_dimension_numbers<[1], [0], [0], [1], [0, 0, 1, 1], [], []>} : vector<16x64xbf16>, vector<64x128xbf16>, vector<16x128xf32> -> vector<16x128xf32>
    %15 = arith.addf %10, %14 : vector<16x128xf32>
    %c0_11 = arith.constant 0 : index
    %c0_12 = arith.constant 0 : index
    %16 = vector.load %arg3[%c0_11, %c0_12] : memref<1x128xf32, #tpu.memory_space<vmem>>, vector<1x128xf32>
    %17 = vector.broadcast %16 : vector<1x128xf32> to vector<16x128xf32>
    %18 = arith.addf %15, %17 : vector<16x128xf32>
    %cst_13 = arith.constant 0.000000e+00 : f32
    %19 = vector.broadcast %cst_13 : f32 to vector<16x128xf32>
    %20 = arith.maximumf %18, %19 : vector<16x128xf32>
    %cst_14 = arith.constant 0.000000e+00 : f32
    %21 = vector.broadcast %cst_14 : f32 to vector<1x128xf32>
    %22 = tpu.concatenate %21, %20, %21 in 0 : vector<1x128xf32>, vector<16x128xf32>, vector<1x128xf32> -> vector<18x128xf32>
    %23 = arith.truncf %22 : vector<18x128xf32> to vector<18x128xbf16>
    %24 = vector.extract_strided_slice %23 {offsets = [0, 0], sizes = [16, 128], strides = [1, 1]} : vector<18x128xbf16> to vector<16x128xbf16>
    %c0_15 = arith.constant 0 : index
    %c0_16 = arith.constant 0 : index
    %c0_17 = arith.constant 0 : index
    %25 = vector.load %arg4[%c0_15, %c0_16, %c0_17] : memref<3x128x128xbf16, #tpu.memory_space<vmem>>, vector<1x128x128xbf16>
    %26 = vector.shape_cast %25 : vector<1x128x128xbf16> to vector<128x128xbf16>
    %cst_18 = arith.constant dense<0.000000e+00> : vector<16x128xf32>
    %27 = tpu.matmul %24, %26, %cst_18 {dimension_numbers = #tpu.dot_dimension_numbers<[1], [0], [0], [1], [0, 0, 1, 1], [], []>} : vector<16x128xbf16>, vector<128x128xbf16>, vector<16x128xf32> -> vector<16x128xf32>
    %28 = vector.extract_strided_slice %23 {offsets = [1, 0], sizes = [16, 128], strides = [1, 1]} : vector<18x128xbf16> to vector<16x128xbf16>
    %c1_19 = arith.constant 1 : index
    %c0_20 = arith.constant 0 : index
    %c0_21 = arith.constant 0 : index
    %29 = vector.load %arg4[%c1_19, %c0_20, %c0_21] : memref<3x128x128xbf16, #tpu.memory_space<vmem>>, vector<1x128x128xbf16>
    %30 = vector.shape_cast %29 : vector<1x128x128xbf16> to vector<128x128xbf16>
    %cst_22 = arith.constant dense<0.000000e+00> : vector<16x128xf32>
    %31 = tpu.matmul %28, %30, %cst_22 {dimension_numbers = #tpu.dot_dimension_numbers<[1], [0], [0], [1], [0, 0, 1, 1], [], []>} : vector<16x128xbf16>, vector<128x128xbf16>, vector<16x128xf32> -> vector<16x128xf32>
    %32 = arith.addf %27, %31 : vector<16x128xf32>
    %33 = vector.extract_strided_slice %23 {offsets = [2, 0], sizes = [16, 128], strides = [1, 1]} : vector<18x128xbf16> to vector<16x128xbf16>
    %c2_23 = arith.constant 2 : index
    %c0_24 = arith.constant 0 : index
    %c0_25 = arith.constant 0 : index
    %34 = vector.load %arg4[%c2_23, %c0_24, %c0_25] : memref<3x128x128xbf16, #tpu.memory_space<vmem>>, vector<1x128x128xbf16>
    %35 = vector.shape_cast %34 : vector<1x128x128xbf16> to vector<128x128xbf16>
    %cst_26 = arith.constant dense<0.000000e+00> : vector<16x128xf32>
    %36 = tpu.matmul %33, %35, %cst_26 {dimension_numbers = #tpu.dot_dimension_numbers<[1], [0], [0], [1], [0, 0, 1, 1], [], []>} : vector<16x128xbf16>, vector<128x128xbf16>, vector<16x128xf32> -> vector<16x128xf32>
    %37 = arith.addf %32, %36 : vector<16x128xf32>
    %c0_27 = arith.constant 0 : index
    %c0_28 = arith.constant 0 : index
    %38 = vector.load %arg5[%c0_27, %c0_28] : memref<1x128xf32, #tpu.memory_space<vmem>>, vector<1x128xf32>
    %39 = vector.broadcast %38 : vector<1x128xf32> to vector<16x128xf32>
    %40 = arith.addf %37, %39 : vector<16x128xf32>
    %cst_29 = arith.constant 0.000000e+00 : f32
    %41 = vector.broadcast %cst_29 : f32 to vector<16x128xf32>
    %42 = arith.maximumf %40, %41 : vector<16x128xf32>
    %43 = vector.extract_strided_slice %1 {offsets = [1, 0], sizes = [16, 64], strides = [1, 1]} : vector<18x64xbf16> to vector<16x64xbf16>
    %c0_30 = arith.constant 0 : index
    %c0_31 = arith.constant 0 : index
    %44 = vector.load %arg6[%c0_30, %c0_31] : memref<64x128xbf16, #tpu.memory_space<vmem>>, vector<64x128xbf16>
    %cst_32 = arith.constant dense<0.000000e+00> : vector<16x128xf32>
    %45 = tpu.matmul %43, %44, %cst_32 {dimension_numbers = #tpu.dot_dimension_numbers<[1], [0], [0], [1], [0, 0, 1, 1], [], []>} : vector<16x64xbf16>, vector<64x128xbf16>, vector<16x128xf32> -> vector<16x128xf32>
    %46 = arith.addf %42, %45 : vector<16x128xf32>
    %c0_33 = arith.constant 0 : index
    %c0_34 = arith.constant 0 : index
    %47 = vector.load %arg7[%c0_33, %c0_34] : memref<1x128xf32, #tpu.memory_space<vmem>>, vector<1x128xf32>
    %48 = vector.broadcast %47 : vector<1x128xf32> to vector<16x128xf32>
    %49 = arith.addf %46, %48 : vector<16x128xf32>
    %c0_35 = arith.constant 0 : index
    %c0_36 = arith.constant 0 : index
    %c0_37 = arith.constant 0 : index
    %50 = vector.load %arg8[%c0_35, %c0_36, %c0_37] : memref<1x16x128xf32, #tpu.memory_space<vmem>>, vector<1x16x128xf32>
    %51 = vector.shape_cast %50 : vector<1x16x128xf32> to vector<16x128xf32>
    %52 = vector.shape_cast %49 : vector<16x128xf32> to vector<1x16x128xf32>
    tpu.vector_store %arg8[%c0_35, %c0_36, %c0_37], %52 {strides = array<i32>} : memref<1x16x128xf32, #tpu.memory_space<vmem>>, vector<1x16x128xf32>,
    return
  }
  func.func @transform_0(%arg0: i32) -> (i32, i32, i32) {
    %c0_i32 = arith.constant 0 : i32
    %c0_i32_0 = arith.constant 0 : i32
    %c0_i32_1 = arith.constant 0 : i32
    return %arg0, %c0_i32, %c0_i32_0 : i32, i32, i32
  }
  func.func @transform_1(%arg0: i32) -> (i32, i32, i32) {
    %c0_i32 = arith.constant 0 : i32
    %c0_i32_0 = arith.constant 0 : i32
    %c0_i32_1 = arith.constant 0 : i32
    %c0_i32_2 = arith.constant 0 : i32
    return %c0_i32, %c0_i32_0, %c0_i32_1 : i32, i32, i32
  }
  func.func @transform_2(%arg0: i32) -> (i32, i32) {
    %c0_i32 = arith.constant 0 : i32
    %c0_i32_0 = arith.constant 0 : i32
    %c0_i32_1 = arith.constant 0 : i32
    return %c0_i32, %c0_i32_0 : i32, i32
  }
  func.func @transform_3(%arg0: i32) -> (i32, i32, i32) {
    %c0_i32 = arith.constant 0 : i32
    %c0_i32_0 = arith.constant 0 : i32
    %c0_i32_1 = arith.constant 0 : i32
    %c0_i32_2 = arith.constant 0 : i32
    return %c0_i32, %c0_i32_0, %c0_i32_1 : i32, i32, i32
  }
  func.func @transform_4(%arg0: i32) -> (i32, i32) {
    %c0_i32 = arith.constant 0 : i32
    %c0_i32_0 = arith.constant 0 : i32
    %c0_i32_1 = arith.constant 0 : i32
    return %c0_i32, %c0_i32_0 : i32, i32
  }
  func.func @transform_5(%arg0: i32) -> (i32, i32) {
    %c0_i32 = arith.constant 0 : i32
    %c0_i32_0 = arith.constant 0 : i32
    %c0_i32_1 = arith.constant 0 : i32
    return %c0_i32, %c0_i32_0 : i32, i32
  }
  func.func @transform_6(%arg0: i32) -> (i32, i32) {
    %c0_i32 = arith.constant 0 : i32
    %c0_i32_0 = arith.constant 0 : i32
    %c0_i32_1 = arith.constant 0 : i32
    return %c0_i32, %c0_i32_0 : i32, i32
  }
  func.func @transform_7(%arg0: i32) -> (i32, i32, i32) {
    %c0_i32 = arith.constant 0 : i32
    %c0_i32_0 = arith.constant 0 : i32
    %c0_i32_1 = arith.constant 0 : i32
    return %arg0, %c0_i32, %c0_i32_0 : i32, i32, i32
  }
}

</mosaic_0001>

<llo_original>
// kernel: tpu_custom_call.1
$region0: #{tpu_custom_call.1}
  #allocation0 [shape = 'u32[]', space=smem, size = 0x4, offset = 0x4, fixed_abs, tag = 'smem constant byte address 0x4 - core index']
  #allocation1 [shape = 'u32[72,128]{1,0:T(1,128)}', space=vmem, size = 0x9000, scoped, tag = 'internal scratch']
  %s0 = inlined_call_operand.vmem [shape: bf16[2,18,64], index: 0, kind: input, shape index: {}]
  %s1 = inlined_call_operand.hbm [shape: bf16[3,64,128], index: 1, kind: input, shape index: {}]
  %s2 = inlined_call_operand.vmem [shape: f32[1,128], index: 2, kind: input, shape index: {}]
  %s3 = inlined_call_operand.hbm [shape: bf16[3,128,128], index: 3, kind: input, shape index: {}]
  %s4 = inlined_call_operand.vmem [shape: f32[1,128], index: 4, kind: input, shape index: {}]
  %s5 = inlined_call_operand.vmem [shape: bf16[64,128], index: 5, kind: input, shape index: {}]
  %s6 = inlined_call_operand.vmem [shape: f32[1,128], index: 6, kind: input, shape index: {}]
  %s7 = inlined_call_operand.hbm [shape: f32[2,16,128], index: 7, kind: output, shape index: {}]
  %s8 = sld [smem:[#allocation0]]
  $region69: #{tpu_custom_call.1} parent=0
    _
  %s10 = ssub.s32 1, %s8
  %s11 = scalar_select 0, %s10, %s8
  $region1: #{tpu_custom_call.1} parent=0
    #allocation2 [shape = 'u8[49152]{0}', space=vmem, size = 0xc000, scoped, tag = 'input window, operand 1, single buffered']
    #allocation3 [shape = 's32[2]{0}', space=sflag, size = 0x8, scoped, tag = 'scoped memory for tpu_custom_call.1']
    #allocation4 [shape = 's32[2]{0}', space=sflag, size = 0x8, scoped, tag = 'scoped memory for tpu_custom_call.1']
    #allocation5 [shape = 'u8[98304]{0}', space=vmem, size = 0x18000, scoped, tag = 'input window, operand 3, single buffered']
    #allocation6 [shape = 's32[1]{0}', space=sflag, size = 0x4, scoped, tag = 'scoped memory for tpu_custom_call.1']
    #allocation7 [shape = 'u8[16384]{0}', space=vmem, size = 0x4000, scoped, tag = 'output window, operand 0']
    %12 = vsyncpa [#allocation3], 0
    %13 = vsyncpa [#allocation6], 0
    %14 = vsyncpa [#allocation4], 0
    %s15 = scalar_lea.sflag [#allocation4], 1
    %16 = vsyncpa %s15, 0
    loop: start=0, step=1, limit=4
    $region2: #{tpu_custom_call.1} parent=1 // loop_pre_header
      _
    $region3: #{tpu_custom_call.1} parent=1 // loop_header
      %s18 = sphi 0, %s22
      %p19 = scmp.ge.s32.totalorder %s18, 4
      %s28 = sphi 0, %s30
      %s31 = sphi 0, %s28
      %s32 = sphi 0, %s31
      %s48 = sphi 0, %s32
      %s52 = sphi 0, %s52
      %s54 = sphi 0, %s52
      %s55 = sphi 0, %s54
      %s69 = sphi 0, %s55
      %s73 = sphi 0, %s73
      %s75 = sphi 0, %s73
      %s76 = sphi 0, %s75
      %s90 = sphi 0, %s76
      %s94 = sphi 0, %s94
      %s96 = sphi 0, %s94
      %s97 = sphi 0, %s96
      %s111 = sphi 0, %s97
      %s115 = sphi 0, %s115
      %s117 = sphi 0, %s115
      %s118 = sphi 0, %s117
      %s132 = sphi 0, %s118
      %s136 = sphi 0, %s136
      %s138 = sphi 0, %s136
      %s139 = sphi 0, %s138
      %s153 = sphi 0, %s139
      %s157 = sphi 0, %s157
      %s159 = sphi 0, %s157
      %s160 = sphi 0, %s159
      %s174 = sphi 0, %s160
      %s180 = sphi 0, %s182
      %s183 = sphi 0, %s180
      %s184 = sphi 0, %s183
      %s200 = sphi 0, %s184
    $region4: #{tpu_custom_call.1} parent=1 // loop_header_branch
      %21 = sbr.rel (%p19) target = $region8
    $region5: #{tpu_custom_call.1} parent=1 // loop_body
      %s23 = ssub.s32 %s18, 1
      %s24 = ssub.s32 %s18, 2
      %s25 = sadd.s32 %s18, 1
      %s26 = ssub.s32 %s18, %s25
      %p27 = scmp.eq.s32.totalorder %s26, 0
      %s29 = sadd.s32 %s28, 1
      %s30 = scalar_select %p27, %s28, %s29
      %p33 = pneg %p27
      %p34 = scmp.eq.s32.totalorder %s18, 1
      %p35 = por %p33, %p34
      %p36 = scmp.ne.s32.totalorder %s28, %s31
      %p37 = scmp.eq.s32.totalorder %s18, 0
      %p38 = por %p36, %p37
      %p39 = scmp.ne.s32.totalorder %s28, %s31
      %p40 = scmp.eq.s32.totalorder %s23, 1
      %p41 = por %p39, %p40
      %p42 = scmp.ne.s32.totalorder %s31, %s32
      %p43 = scmp.eq.s32.totalorder %s23, 0
      %p44 = por %p42, %p43
      %p45 = scmp.ne.s32.totalorder %s31, %s32
      %p46 = scmp.eq.s32.totalorder %s24, 1
      %p47 = por %p45, %p46
      %p49 = scmp.ne.s32.totalorder %s32, %s48
      %p50 = scmp.eq.s32.totalorder %s24, 0
      %p51 = por %p49, %p50
      %s53 = sadd.s32 %s52, 1
      %p56 = scmp.eq.s32.totalorder %s18, 1
      %p57 = scmp.ne.s32.totalorder %s52, %s54
      %p58 = scmp.eq.s32.totalorder %s18, 0
      %p59 = por %p57, %p58
      %p60 = scmp.ne.s32.totalorder %s52, %s54
      %p61 = scmp.eq.s32.totalorder %s23, 1
      %p62 = por %p60, %p61
      %p63 = scmp.ne.s32.totalorder %s54, %s55
      %p64 = scmp.eq.s32.totalorder %s23, 0
      %p65 = por %p63, %p64
      %p66 = scmp.ne.s32.totalorder %s54, %s55
      %p67 = scmp.eq.s32.totalorder %s24, 1
      %p68 = por %p66, %p67
      %p70 = scmp.ne.s32.totalorder %s55, %s69
      %p71 = scmp.eq.s32.totalorder %s24, 0
      %p72 = por %p70, %p71
      %s74 = sadd.s32 %s73, 1
      %p77 = scmp.eq.s32.totalorder %s18, 1
      %p78 = scmp.ne.s32.totalorder %s73, %s75
      %p79 = scmp.eq.s32.totalorder %s18, 0
      %p80 = por %p78, %p79
      %p81 = scmp.ne.s32.totalorder %s73, %s75
      %p82 = scmp.eq.s32.totalorder %s23, 1
      %p83 = por %p81, %p82
      %p84 = scmp.ne.s32.totalorder %s75, %s76
      %p85 = scmp.eq.s32.totalorder %s23, 0
      %p86 = por %p84, %p85
      %p87 = scmp.ne.s32.totalorder %s75, %s76
      %p88 = scmp.eq.s32.totalorder %s24, 1
      %p89 = por %p87, %p88
      %p91 = scmp.ne.s32.totalorder %s76, %s90
      %p92 = scmp.eq.s32.totalorder %s24, 0
      %p93 = por %p91, %p92
      %s95 = sadd.s32 %s94, 1
      %p98 = scmp.eq.s32.totalorder %s18, 1
      %p99 = scmp.ne.s32.totalorder %s94, %s96
      %p100 = scmp.eq.s32.totalorder %s18, 0
      %p101 = por %p99, %p100
      %p102 = scmp.ne.s32.totalorder %s94, %s96
      %p103 = scmp.eq.s32.totalorder %s23, 1
      %p104 = por %p102, %p103
      %p105 = scmp.ne.s32.totalorder %s96, %s97
      %p106 = scmp.eq.s32.totalorder %s23, 0
      %p107 = por %p105, %p106
      %p108 = scmp.ne.s32.totalorder %s96, %s97
      %p109 = scmp.eq.s32.totalorder %s24, 1
      %p110 = por %p108, %p109
      %p112 = scmp.ne.s32.totalorder %s97, %s111
      %p113 = scmp.eq.s32.totalorder %s24, 0
      %p114 = por %p112, %p113
      %s116 = sadd.s32 %s115, 1
      %p119 = scmp.eq.s32.totalorder %s18, 1
      %p120 = scmp.ne.s32.totalorder %s115, %s117
      %p121 = scmp.eq.s32.totalorder %s18, 0
      %p122 = por %p120, %p121
      %p123 = scmp.ne.s32.totalorder %s115, %s117
      %p124 = scmp.eq.s32.totalorder %s23, 1
      %p125 = por %p123, %p124
      %p126 = scmp.ne.s32.totalorder %s117, %s118
      %p127 = scmp.eq.s32.totalorder %s23, 0
      %p128 = por %p126, %p127
      %p129 = scmp.ne.s32.totalorder %s117, %s118
      %p130 = scmp.eq.s32.totalorder %s24, 1
      %p131 = por %p129, %p130
      %p133 = scmp.ne.s32.totalorder %s118, %s132
      %p134 = scmp.eq.s32.totalorder %s24, 0
      %p135 = por %p133, %p134
      %s137 = sadd.s32 %s136, 1
      %p140 = scmp.eq.s32.totalorder %s18, 1
      %p141 = scmp.ne.s32.totalorder %s136, %s138
      %p142 = scmp.eq.s32.totalorder %s18, 0
      %p143 = por %p141, %p142
      %p144 = scmp.ne.s32.totalorder %s136, %s138
      %p145 = scmp.eq.s32.totalorder %s23, 1
      %p146 = por %p144, %p145
      %p147 = scmp.ne.s32.totalorder %s138, %s139
      %p148 = scmp.eq.s32.totalorder %s23, 0
      %p149 = por %p147, %p148
      %p150 = scmp.ne.s32.totalorder %s138, %s139
      %p151 = scmp.eq.s32.totalorder %s24, 1
      %p152 = por %p150, %p151
      %p154 = scmp.ne.s32.totalorder %s139, %s153
      %p155 = scmp.eq.s32.totalorder %s24, 0
      %p156 = por %p154, %p155
      %s158 = sadd.s32 %s157, 1
      %p161 = scmp.eq.s32.totalorder %s18, 1
      %p162 = scmp.ne.s32.totalorder %s157, %s159
      %p163 = scmp.eq.s32.totalorder %s18, 0
      %p164 = por %p162, %p163
      %p165 = scmp.ne.s32.totalorder %s157, %s159
      %p166 = scmp.eq.s32.totalorder %s23, 1
      %p167 = por %p165, %p166
      %p168 = scmp.ne.s32.totalorder %s159, %s160
      %p169 = scmp.eq.s32.totalorder %s23, 0
      %p170 = por %p168, %p169
      %p171 = scmp.ne.s32.totalorder %s159, %s160
      %p172 = scmp.eq.s32.totalorder %s24, 1
      %p173 = por %p171, %p172
      %p175 = scmp.ne.s32.totalorder %s160, %s174
      %p176 = scmp.eq.s32.totalorder %s24, 0
      %p177 = por %p175, %p176
      %s178 = ssub.s32 %s18, %s25
      %p179 = scmp.eq.s32.totalorder %s178, 0
      %s181 = sadd.s32 %s180, 1
      %s182 = scalar_select %p179, %s180, %s181
      %p185 = pneg %p179
      %p186 = scmp.eq.s32.totalorder %s18, 1
      %p187 = por %p185, %p186
      %p188 = scmp.ne.s32.totalorder %s180, %s183
      %p189 = scmp.eq.s32.totalorder %s18, 0
      %p190 = por %p188, %p189
      %p191 = scmp.ne.s32.totalorder %s180, %s183
      %p192 = scmp.eq.s32.totalorder %s23, 1
      %p193 = por %p191, %p192
      %p194 = scmp.ne.s32.totalorder %s183, %s184
      %p195 = scmp.eq.s32.totalorder %s23, 0
      %p196 = por %p194, %p195
      %p197 = scmp.ne.s32.totalorder %s183, %s184
      %p198 = scmp.eq.s32.totalorder %s24, 1
      %p199 = por %p197, %p198
      %p201 = scmp.ne.s32.totalorder %s184, %s200
      %p202 = scmp.eq.s32.totalorder %s24, 0
      %p203 = por %p201, %p202
      %p204 = scmp.le.s32.totalorder 1, %s18
      %p205 = scmp.lt.s32.totalorder %s18, 3
      %p206 = pnand %p204, %p205
      %p207 = pneg %p206
      // Predicated region
      $region9: #{tpu_custom_call.1} parent=5 // pred_check
        _
      $region10: #{tpu_custom_call.1} parent=5 // pred_check_branch
        %209 = sbr.rel (%p206) target = $region12
      $region11: #{tpu_custom_call.1} parent=5 // pred_region
        %s210 = ssub.s32 %s18, 1
        // Predicated region
        $region13: #{tpu_custom_call.1} parent=11 // pred_check
          %p211 = pneg %p65
        $region14: #{tpu_custom_call.1} parent=11 // pred_check_branch
          %213 = sbr.rel (%p211) target = $region16
        $region15: #{tpu_custom_call.1} parent=11 // pred_region
          %215 = vsyncadd [#allocation3], 0
          %s216 = sshll.u32 %s1, 4
          %s217 = int_to_ptr.hbm [resolvable:$true] %s216
          %s218 = sshll.u32 [#allocation2], 4
          %s219 = int_to_ptr.vmem [resolvable:$true] %s218
          %224 = dma.hbm_to_vmem [thread:$0]  %s217, 1536, %s219, [#allocation3], 64, 64, 4
        $region16: #{tpu_custom_call.1} parent=11 // pred_fallthru
          _
        // Predicated region
        $region17: #{tpu_custom_call.1} parent=11 // pred_check
          %p225 = pneg %p86
        $region18: #{tpu_custom_call.1} parent=11 // pred_check_branch
          %227 = sbr.rel (%p225) target = $region20
        $region19: #{tpu_custom_call.1} parent=11 // pred_region
          _
        $region20: #{tpu_custom_call.1} parent=11 // pred_fallthru
          _
        // Predicated region
        $region21: #{tpu_custom_call.1} parent=11 // pred_check
          %p228 = pneg %p107
        $region22: #{tpu_custom_call.1} parent=11 // pred_check_branch
          %230 = sbr.rel (%p228) target = $region24
        $region23: #{tpu_custom_call.1} parent=11 // pred_region
          %232 = vsyncadd [#allocation6], 0
          %s233 = sshll.u32 %s3, 4
          %s234 = int_to_ptr.hbm [resolvable:$true] %s233
          %s235 = sshll.u32 [#allocation5], 4
          %s236 = int_to_ptr.vmem [resolvable:$true] %s235
          %241 = dma.hbm_to_vmem [thread:$0]  %s234, 3072, %s236, [#allocation6], 64, 64, 4
        $region24: #{tpu_custom_call.1} parent=11 // pred_fallthru
          _
        // Predicated region
        $region25: #{tpu_custom_call.1} parent=11 // pred_check
          %p242 = pneg %p128
        $region26: #{tpu_custom_call.1} parent=11 // pred_check_branch
          %244 = sbr.rel (%p242) target = $region28
        $region27: #{tpu_custom_call.1} parent=11 // pred_region
          _
        $region28: #{tpu_custom_call.1} parent=11 // pred_fallthru
          _
        // Predicated region
        $region29: #{tpu_custom_call.1} parent=11 // pred_check
          %p245 = pneg %p149
        $region30: #{tpu_custom_call.1} parent=11 // pred_check_branch
          %247 = sbr.rel (%p245) target = $region32
        $region31: #{tpu_custom_call.1} parent=11 // pred_region
          _
        $region32: #{tpu_custom_call.1} parent=11 // pred_fallthru
          _
        // Predicated region
        $region33: #{tpu_custom_call.1} parent=11 // pred_check
          %p248 = pneg %p170
        $region34: #{tpu_custom_call.1} parent=11 // pred_check_branch
          %250 = sbr.rel (%p248) target = $region36
        $region35: #{tpu_custom_call.1} parent=11 // pred_region
          _
        $region36: #{tpu_custom_call.1} parent=11 // pred_fallthru
          _
      $region12: #{tpu_custom_call.1} parent=5 // pred_fallthru
        _
      %p251 = scmp.lt.s32.totalorder %s18, 2
      // Predicated region
      $region37: #{tpu_custom_call.1} parent=5 // pred_check
        %p252 = pneg %p251
      $region38: #{tpu_custom_call.1} parent=5 // pred_check_branch
        %254 = sbr.rel (%p252) target = $region40
      $region39: #{tpu_custom_call.1} parent=5 // pred_region
        // Predicated region
        $region41: #{tpu_custom_call.1} parent=39 // pred_check
          %p255 = pneg %p38
        $region42: #{tpu_custom_call.1} parent=39 // pred_check_branch
          %257 = sbr.rel (%p255) target = $region44
        $region43: #{tpu_custom_call.1} parent=39 // pred_region
          %p258 = scmp.lt.s32.totalorder %s18, 1
          %s259 = scalar_select %p258, %s18, 1
          %s260 = smul.addr %s259, 3
          %s261 = smul.addr %s260, 4
          %s262 = scalar_lea.vmem %s0, %s261
        $region44: #{tpu_custom_call.1} parent=39 // pred_fallthru
          _
      $region40: #{tpu_custom_call.1} parent=5 // pred_fallthru
        _
      %p263 = scmp.le.s32.totalorder 1, %s18
      %p264 = scmp.lt.s32.totalorder %s18, 3
      %p265 = pnand %p263, %p264
      %p266 = pneg %p265
      // Predicated region
      $region45: #{tpu_custom_call.1} parent=5 // pred_check
        _
      $region46: #{tpu_custom_call.1} parent=5 // pred_check_branch
        %268 = sbr.rel (%p265) target = $region48
      $region47: #{tpu_custom_call.1} parent=5 // pred_region
        %s269 = ssub.s32 %s18, 1
        // Predicated region
        $region49: #{tpu_custom_call.1} parent=47 // pred_check
          %p270 = pneg %p65
        $region50: #{tpu_custom_call.1} parent=47 // pred_check_branch
          %272 = sbr.rel (%p270) target = $region52
        $region51: #{tpu_custom_call.1} parent=47 // pred_region
          %274 = dma.done [#allocation3], 1536
        $region52: #{tpu_custom_call.1} parent=47 // pred_fallthru
          _
        // Predicated region
        $region53: #{tpu_custom_call.1} parent=47 // pred_check
          %p275 = pneg %p107
        $region54: #{tpu_custom_call.1} parent=47 // pred_check_branch
          %277 = sbr.rel (%p275) target = $region56
        $region55: #{tpu_custom_call.1} parent=47 // pred_region
          %279 = dma.done [#allocation6], 3072
        $region56: #{tpu_custom_call.1} parent=47 // pred_fallthru
          _
        %p280 = scmp.lt.s32.totalorder %s23, 1
        %s281 = scalar_select %p280, %s23, 1
        %s282 = smul.addr %s281, 3
        %s283 = smul.addr %s282, 4
        %s284 = scalar_lea.vmem %s0, %s283
        %p285 = pneg %p44
        %p286 = pneg %p41
        %p287 = pneg %p65
        %p288 = pneg %p62
        %p289 = pneg %p86
        %p290 = pneg %p83
        %p291 = pneg %p107
        %p292 = pneg %p104
        %p293 = pneg %p128
        %p294 = pneg %p125
        %p295 = pneg %p149
        %p296 = pneg %p146
        %p297 = pneg %p170
        %p298 = pneg %p167
        %p299 = pneg %p196
        %p300 = pneg %p193
        %s301 = sand.u32 %s183, 1
        %s302 = scalar_lea.sflag [#allocation4], %s301
        %s303 = sand.u32 %s183, 1
        %s304 = smul.addr %s303, 16
        %s305 = scalar_lea.vmem [#allocation7], %s304
        %p306 = scmp.lt.s32.totalorder %s23, 1
        %s307 = scalar_select %p306, %s23, 1
        %s308 = smul.addr %s307, 3
        %s309 = smul.addr %s308, 4
        %s310 = scalar_lea.vmem %s0, %s309
        %v312 = vld [vmem:[%s310] sm:$0xf]
        %v313 = vld [vmem:[%s310 + $0x4] sm:$0xf]
        %v314 = vld [vmem:[%s310 + $0x8] sm:$0x1]
        %v315 = vld [vmem:[#allocation2] sm:$0xf]
        %v316 = vld [vmem:[#allocation2 + $0x4] sm:$0xf]
        %v317 = vld [vmem:[#allocation2 + $0x8] sm:$0xf]
        %v318 = vld [vmem:[#allocation2 + $0xc] sm:$0xf]
        %v319 = vld [vmem:[#allocation2 + $0x10] sm:$0xf]
        %v320 = vld [vmem:[#allocation2 + $0x14] sm:$0xf]
        %v321 = vld [vmem:[#allocation2 + $0x18] sm:$0xf]
        %v322 = vld [vmem:[#allocation2 + $0x1c] sm:$0xf]
        %s323 = scalar_lea.vmem [#allocation2], 32
        %v324 = vld [vmem:[%s323] sm:$0xf]
        %v325 = vld [vmem:[%s323 + $0x4] sm:$0xf]
        %v326 = vld [vmem:[%s323 + $0x8] sm:$0xf]
        %v327 = vld [vmem:[%s323 + $0xc] sm:$0xf]
        %v328 = vld [vmem:[%s323 + $0x10] sm:$0xf]
        %v329 = vld [vmem:[%s323 + $0x14] sm:$0xf]
        %v330 = vld [vmem:[%s323 + $0x18] sm:$0xf]
        %v331 = vld [vmem:[%s323 + $0x1c] sm:$0xf]
        %v335 = vunpack.c.l.b16 %v312
        %v336 = vunpack.c.l.b16 %v313
        %v337 = vunpack.c.l.b16 %v314
        %v338 = vpack.c.b16 %v336, %v335
        %v339 = vpack.c.b16 %v337, %v337
        %vm340 = vsmask.f32 7424
        %v342 = vshrl.u32 %v338, 16
        %v344 = vshll.u32 %v338, 16
        %v346 = vrot.slane %v344, 1
        %v347 = vor.u32 %v342, %v346
        %v349 = vshll.u32 %v339, 16
        %v351 = vrot.slane %v349, 1
        %v352 = vsel %vm340, %v347, %v351
        %v361 = vunpack.c.l.b16 %v324
        %v362 = vunpack.c.l.b16 %v325
        %v363 = vunpack.c.l.b16 %v326
        %v364 = vunpack.c.l.b16 %v327
        %v365 = vunpack.c.l.b16 %v328
        %v366 = vunpack.c.l.b16 %v329
        %v367 = vunpack.c.l.b16 %v330
        %v368 = vunpack.c.l.b16 %v331
        %v369 = vpack.c.b16 %v362, %v361
        %v370 = vpack.c.b16 %v364, %v363
        %v371 = vpack.c.b16 %v366, %v365
        %v372 = vpack.c.b16 %v368, %v367
        %vm377 = vcmask 523264
        %v379 = vsel %vm377, %v352, 0
        %381 = vmatpush.bf16.msra.mxu0 0
        %382 = vmatpush.bf16.msra.mxu0 0
        %383 = vmatpush.bf16.msra.mxu0 0
        %384 = vmatpush.bf16.msra.mxu0 0
        %385 = vmatpush.bf16.msra.mxu0 %v372
        %386 = vmatpush.bf16.msra.mxu0 %v371
        %387 = vmatpush.bf16.msra.mxu0 %v370
        %388 = vmatpush.bf16.msra.mxu0 %v369
        %389 = vmatmul.bf16.gmra.mxu0 %v379
        %v390 = vpop.f32.mrf.mxu0
        %v391 = vadd.f32 0.0, %v390
        %v392 = vpop.f32.mrf.mxu0
        %v393 = vadd.f32 0.0, %v392
        %394 = vdwg.mxu0
        %v403 = vunpack.c.l.b16 %v315
        %v404 = vunpack.c.l.b16 %v316
        %v405 = vunpack.c.l.b16 %v317
        %v406 = vunpack.c.l.b16 %v318
        %v407 = vunpack.c.l.b16 %v319
        %v408 = vunpack.c.l.b16 %v320
        %v409 = vunpack.c.l.b16 %v321
        %v410 = vunpack.c.l.b16 %v322
        %v411 = vpack.c.b16 %v404, %v403
        %v412 = vpack.c.b16 %v406, %v405
        %v413 = vpack.c.b16 %v408, %v407
        %v414 = vpack.c.b16 %v410, %v409
        %v419 = vsel %vm377, %v338, 0
        %421 = vmatpush.bf16.msra.mxu0 0
        %422 = vmatpush.bf16.msra.mxu0 0
        %423 = vmatpush.bf16.msra.mxu0 0
        %424 = vmatpush.bf16.msra.mxu0 0
        %425 = vmatpush.bf16.msra.mxu0 %v414
        %426 = vmatpush.bf16.msra.mxu0 %v413
        %427 = vmatpush.bf16.msra.mxu0 %v412
        %428 = vmatpush.bf16.msra.mxu0 %v411
        %429 = vmatmul.bf16.gmra.mxu0 %v419
        %v430 = vpop.f32.mrf.mxu0
        %v431 = vadd.f32 %v391, %v430
        %v432 = vpop.f32.mrf.mxu0
        %v433 = vadd.f32 %v393, %v432
        %434 = vdwg.mxu0
        %s435 = scalar_lea.vmem [#allocation2], 64
        %v436 = vld [vmem:[%s435] sm:$0xf]
        %v437 = vld [vmem:[%s435 + $0x4] sm:$0xf]
        %v438 = vld [vmem:[%s435 + $0x8] sm:$0xf]
        %v439 = vld [vmem:[%s435 + $0xc] sm:$0xf]
        %v440 = vld [vmem:[%s435 + $0x10] sm:$0xf]
        %v441 = vld [vmem:[%s435 + $0x14] sm:$0xf]
        %v442 = vld [vmem:[%s435 + $0x18] sm:$0xf]
        %v443 = vld [vmem:[%s435 + $0x1c] sm:$0xf]
        %vm444 = vcmask 1046528
        %v445 = vrot.slane %v338, 1
        %v446 = vrot.slane %v339, 1
        %v447 = vsel %vm444, %v445, %v446
        %v456 = vunpack.c.l.b16 %v436
        %v457 = vunpack.c.l.b16 %v437
        %v458 = vunpack.c.l.b16 %v438
        %v459 = vunpack.c.l.b16 %v439
        %v460 = vunpack.c.l.b16 %v440
        %v461 = vunpack.c.l.b16 %v441
        %v462 = vunpack.c.l.b16 %v442
        %v463 = vunpack.c.l.b16 %v443
        %v464 = vpack.c.b16 %v457, %v456
        %v465 = vpack.c.b16 %v459, %v458
        %v466 = vpack.c.b16 %v461, %v460
        %v467 = vpack.c.b16 %v463, %v462
        %v473 = vsel %vm377, %v447, 0
        %475 = vmatpush.bf16.msra.mxu0 0
        %476 = vmatpush.bf16.msra.mxu0 0
        %477 = vmatpush.bf16.msra.mxu0 0
        %478 = vmatpush.bf16.msra.mxu0 0
        %479 = vmatpush.bf16.msra.mxu0 %v467
        %480 = vmatpush.bf16.msra.mxu0 %v466
        %481 = vmatpush.bf16.msra.mxu0 %v465
        %482 = vmatpush.bf16.msra.mxu0 %v464
        %483 = vmatmul.bf16.gmra.mxu0 %v473
        %v484 = vpop.f32.mrf.mxu0
        %v485 = vadd.f32 0.0, %v484
        %v486 = vpop.f32.mrf.mxu0
        %v487 = vadd.f32 0.0, %v486
        %488 = vdwg.mxu0
        %v489 = vadd.f32 %v431, %v485
        %v490 = vadd.f32 %v433, %v487
        %v491 = vld [vmem:[%s2] sm:$0x1]
        %v493 = vperm.slane %v491, 0
        %v495 = vadd.f32 %v489, %v493
        %v496 = vadd.f32 %v490, %v493
        %v497 = vmax.f32 %v495, 0.0
        %v498 = vmax.f32 %v496, 0.0
        %vm501 = vcmask 1040384
        %v502 = vrot.slane %v497, 7
        %v503 = vrot.slane %v498, 7
        %v504 = vsel %vm501, %v502, %v503
        %v508 = vsel %vm501, 0.0, %v502
        %v509 = vsel %vm501, %v503, 0.0
        %v510 = vpack.c.bf16 %v508, %v508
        %v511 = vpack.c.bf16 %v504, %v504
        %v512 = vpack.c.bf16 %v509, %v509
        %v513 = vld [vmem:[#allocation5] sm:$0xf]
        %v514 = vld [vmem:[#allocation5 + $0x4] sm:$0xf]
        %v515 = vld [vmem:[#allocation5 + $0x8] sm:$0xf]
        %v516 = vld [vmem:[#allocation5 + $0xc] sm:$0xf]
        %v517 = vld [vmem:[#allocation5 + $0x10] sm:$0xf]
        %v518 = vld [vmem:[#allocation5 + $0x14] sm:$0xf]
        %v519 = vld [vmem:[#allocation5 + $0x18] sm:$0xf]
        %v520 = vld [vmem:[#allocation5 + $0x1c] sm:$0xf]
        %v521 = vld [vmem:[#allocation5 + $0x20] sm:$0xf]
        %v522 = vld [vmem:[#allocation5 + $0x24] sm:$0xf]
        %v523 = vld [vmem:[#allocation5 + $0x28] sm:$0xf]
        %v524 = vld [vmem:[#allocation5 + $0x2c] sm:$0xf]
        %v525 = vld [vmem:[#allocation5 + $0x30] sm:$0xf]
        %v526 = vld [vmem:[#allocation5 + $0x34] sm:$0xf]
        %v527 = vld [vmem:[#allocation5 + $0x38] sm:$0xf]
        %v528 = vld [vmem:[#allocation5 + $0x3c] sm:$0xf]
        %s529 = scalar_lea.vmem [#allocation5], 64
        %v530 = vld [vmem:[%s529] sm:$0xf]
        %v531 = vld [vmem:[%s529 + $0x4] sm:$0xf]
        %v532 = vld [vmem:[%s529 + $0x8] sm:$0xf]
        %v533 = vld [vmem:[%s529 + $0xc] sm:$0xf]
        %v534 = vld [vmem:[%s529 + $0x10] sm:$0xf]
        %v535 = vld [vmem:[%s529 + $0x14] sm:$0xf]
        %v536 = vld [vmem:[%s529 + $0x18] sm:$0xf]
        %v537 = vld [vmem:[%s529 + $0x1c] sm:$0xf]
        %v538 = vld [vmem:[%s529 + $0x20] sm:$0xf]
        %v539 = vld [vmem:[%s529 + $0x24] sm:$0xf]
        %v540 = vld [vmem:[%s529 + $0x28] sm:$0xf]
        %v541 = vld [vmem:[%s529 + $0x2c] sm:$0xf]
        %v542 = vld [vmem:[%s529 + $0x30] sm:$0xf]
        %v543 = vld [vmem:[%s529 + $0x34] sm:$0xf]
        %v544 = vld [vmem:[%s529 + $0x38] sm:$0xf]
        %v545 = vld [vmem:[%s529 + $0x3c] sm:$0xf]
        %v549 = vunpack.c.l.b16 %v510
        %v550 = vunpack.c.l.b16 %v511
        %v551 = vunpack.c.l.b16 %v512
        %v552 = vpack.c.b16 %v550, %v549
        %v553 = vpack.c.b16 %v551, %v551
        %v555 = vshrl.u32 %v552, 16
        %v557 = vshll.u32 %v552, 16
        %v559 = vrot.slane %v557, 1
        %v560 = vor.u32 %v555, %v559
        %v562 = vshll.u32 %v553, 16
        %v564 = vrot.slane %v562, 1
        %v565 = vsel %vm340, %v560, %v564
        %v583 = vunpack.c.l.b16 %v530
        %v584 = vunpack.c.l.b16 %v531
        %v585 = vunpack.c.l.b16 %v532
        %v586 = vunpack.c.l.b16 %v533
        %v587 = vunpack.c.l.b16 %v534
        %v588 = vunpack.c.l.b16 %v535
        %v589 = vunpack.c.l.b16 %v536
        %v590 = vunpack.c.l.b16 %v537
        %v591 = vunpack.c.l.b16 %v538
        %v592 = vunpack.c.l.b16 %v539
        %v593 = vunpack.c.l.b16 %v540
        %v594 = vunpack.c.l.b16 %v541
        %v595 = vunpack.c.l.b16 %v542
        %v596 = vunpack.c.l.b16 %v543
        %v597 = vunpack.c.l.b16 %v544
        %v598 = vunpack.c.l.b16 %v545
        %v599 = vpack.c.b16 %v584, %v583
        %v600 = vpack.c.b16 %v586, %v585
        %v601 = vpack.c.b16 %v588, %v587
        %v602 = vpack.c.b16 %v590, %v589
        %v603 = vpack.c.b16 %v592, %v591
        %v604 = vpack.c.b16 %v594, %v593
        %v605 = vpack.c.b16 %v596, %v595
        %v606 = vpack.c.b16 %v598, %v597
        %615 = vmatpush.bf16.msra.mxu0 %v606
        %616 = vmatpush.bf16.msra.mxu0 %v605
        %617 = vmatpush.bf16.msra.mxu0 %v604
        %618 = vmatpush.bf16.msra.mxu0 %v603
        %619 = vmatpush.bf16.msra.mxu0 %v602
        %620 = vmatpush.bf16.msra.mxu0 %v601
        %621 = vmatpush.bf16.msra.mxu0 %v600
        %622 = vmatpush.bf16.msra.mxu0 %v599
        %623 = vmatmul.bf16.gmra.mxu0 %v565
        %v624 = vpop.f32.mrf.mxu0
        %v625 = vadd.f32 0.0, %v624
        %v626 = vpop.f32.mrf.mxu0
        %v627 = vadd.f32 0.0, %v626
        %628 = vdwg.mxu0
        %v646 = vunpack.c.l.b16 %v513
        %v647 = vunpack.c.l.b16 %v514
        %v648 = vunpack.c.l.b16 %v515
        %v649 = vunpack.c.l.b16 %v516
        %v650 = vunpack.c.l.b16 %v517
        %v651 = vunpack.c.l.b16 %v518
        %v652 = vunpack.c.l.b16 %v519
        %v653 = vunpack.c.l.b16 %v520
        %v654 = vunpack.c.l.b16 %v521
        %v655 = vunpack.c.l.b16 %v522
        %v656 = vunpack.c.l.b16 %v523
        %v657 = vunpack.c.l.b16 %v524
        %v658 = vunpack.c.l.b16 %v525
        %v659 = vunpack.c.l.b16 %v526
        %v660 = vunpack.c.l.b16 %v527
        %v661 = vunpack.c.l.b16 %v528
        %v662 = vpack.c.b16 %v647, %v646
        %v663 = vpack.c.b16 %v649, %v648
        %v664 = vpack.c.b16 %v651, %v650
        %v665 = vpack.c.b16 %v653, %v652
        %v666 = vpack.c.b16 %v655, %v654
        %v667 = vpack.c.b16 %v657, %v656
        %v668 = vpack.c.b16 %v659, %v658
        %v669 = vpack.c.b16 %v661, %v660
        %678 = vmatpush.bf16.msra.mxu0 %v669
        %679 = vmatpush.bf16.msra.mxu0 %v668
        %680 = vmatpush.bf16.msra.mxu0 %v667
        %681 = vmatpush.bf16.msra.mxu0 %v666
        %682 = vmatpush.bf16.msra.mxu0 %v665
        %683 = vmatpush.bf16.msra.mxu0 %v664
        %684 = vmatpush.bf16.msra.mxu0 %v663
        %685 = vmatpush.bf16.msra.mxu0 %v662
        %686 = vmatmul.bf16.gmra.mxu0 %v552
        %v687 = vpop.f32.mrf.mxu0
        %v688 = vadd.f32 %v625, %v687
        %v689 = vpop.f32.mrf.mxu0
        %v690 = vadd.f32 %v627, %v689
        %691 = vdwg.mxu0
        %s692 = scalar_lea.vmem [#allocation5], 128
        %v693 = vld [vmem:[%s692] sm:$0xf]
        %v694 = vld [vmem:[%s692 + $0x4] sm:$0xf]
        %v695 = vld [vmem:[%s692 + $0x8] sm:$0xf]
        %v696 = vld [vmem:[%s692 + $0xc] sm:$0xf]
        %v697 = vld [vmem:[%s692 + $0x10] sm:$0xf]
        %v698 = vld [vmem:[%s692 + $0x14] sm:$0xf]
        %v699 = vld [vmem:[%s692 + $0x18] sm:$0xf]
        %v700 = vld [vmem:[%s692 + $0x1c] sm:$0xf]
        %v701 = vld [vmem:[%s692 + $0x20] sm:$0xf]
        %v702 = vld [vmem:[%s692 + $0x24] sm:$0xf]
        %v703 = vld [vmem:[%s692 + $0x28] sm:$0xf]
        %v704 = vld [vmem:[%s692 + $0x2c] sm:$0xf]
        %v705 = vld [vmem:[%s692 + $0x30] sm:$0xf]
        %v706 = vld [vmem:[%s692 + $0x34] sm:$0xf]
        %v707 = vld [vmem:[%s692 + $0x38] sm:$0xf]
        %v708 = vld [vmem:[%s692 + $0x3c] sm:$0xf]
        %v709 = vrot.slane %v552, 1
        %v710 = vrot.slane %v553, 1
        %v711 = vsel %vm444, %v709, %v710
        %v729 = vunpack.c.l.b16 %v693
        %v730 = vunpack.c.l.b16 %v694
        %v731 = vunpack.c.l.b16 %v695
        %v732 = vunpack.c.l.b16 %v696
        %v733 = vunpack.c.l.b16 %v697
        %v734 = vunpack.c.l.b16 %v698
        %v735 = vunpack.c.l.b16 %v699
        %v736 = vunpack.c.l.b16 %v700
        %v737 = vunpack.c.l.b16 %v701
        %v738 = vunpack.c.l.b16 %v702
        %v739 = vunpack.c.l.b16 %v703
        %v740 = vunpack.c.l.b16 %v704
        %v741 = vunpack.c.l.b16 %v705
        %v742 = vunpack.c.l.b16 %v706
        %v743 = vunpack.c.l.b16 %v707
        %v744 = vunpack.c.l.b16 %v708
        %v745 = vpack.c.b16 %v730, %v729
        %v746 = vpack.c.b16 %v732, %v731
        %v747 = vpack.c.b16 %v734, %v733
        %v748 = vpack.c.b16 %v736, %v735
        %v749 = vpack.c.b16 %v738, %v737
        %v750 = vpack.c.b16 %v740, %v739
        %v751 = vpack.c.b16 %v742, %v741
        %v752 = vpack.c.b16 %v744, %v743
        %761 = vmatpush.bf16.msra.mxu0 %v752
        %762 = vmatpush.bf16.msra.mxu0 %v751
        %763 = vmatpush.bf16.msra.mxu0 %v750
        %764 = vmatpush.bf16.msra.mxu0 %v749
        %765 = vmatpush.bf16.msra.mxu0 %v748
        %766 = vmatpush.bf16.msra.mxu0 %v747
        %767 = vmatpush.bf16.msra.mxu0 %v746
        %768 = vmatpush.bf16.msra.mxu0 %v745
        %769 = vmatmul.bf16.gmra.mxu0 %v711
        %v770 = vpop.f32.mrf.mxu0
        %v771 = vadd.f32 0.0, %v770
        %v772 = vpop.f32.mrf.mxu0
        %v773 = vadd.f32 0.0, %v772
        %774 = vdwg.mxu0
        %v775 = vadd.f32 %v688, %v771
        %v776 = vadd.f32 %v690, %v773
        %v777 = vld [vmem:[%s4] sm:$0x1]
        %v779 = vperm.slane %v777, 0
        %v781 = vadd.f32 %v775, %v779
        %v782 = vadd.f32 %v776, %v779
        %v783 = vmax.f32 %v781, 0.0
        %v784 = vmax.f32 %v782, 0.0
        %v785 = vld [vmem:[%s5] sm:$0xf]
        %v786 = vld [vmem:[%s5 + $0x4] sm:$0xf]
        %v787 = vld [vmem:[%s5 + $0x8] sm:$0xf]
        %v788 = vld [vmem:[%s5 + $0xc] sm:$0xf]
        %v789 = vld [vmem:[%s5 + $0x10] sm:$0xf]
        %v790 = vld [vmem:[%s5 + $0x14] sm:$0xf]
        %v791 = vld [vmem:[%s5 + $0x18] sm:$0xf]
        %v792 = vld [vmem:[%s5 + $0x1c] sm:$0xf]
        %v801 = vunpack.c.l.b16 %v785
        %v802 = vunpack.c.l.b16 %v786
        %v803 = vunpack.c.l.b16 %v787
        %v804 = vunpack.c.l.b16 %v788
        %v805 = vunpack.c.l.b16 %v789
        %v806 = vunpack.c.l.b16 %v790
        %v807 = vunpack.c.l.b16 %v791
        %v808 = vunpack.c.l.b16 %v792
        %v809 = vpack.c.b16 %v802, %v801
        %v810 = vpack.c.b16 %v804, %v803
        %v811 = vpack.c.b16 %v806, %v805
        %v812 = vpack.c.b16 %v808, %v807
        %817 = vmatpush.bf16.msra.mxu0 0
        %818 = vmatpush.bf16.msra.mxu0 0
        %819 = vmatpush.bf16.msra.mxu0 0
        %820 = vmatpush.bf16.msra.mxu0 0
        %821 = vmatpush.bf16.msra.mxu0 %v812
        %822 = vmatpush.bf16.msra.mxu0 %v811
        %823 = vmatpush.bf16.msra.mxu0 %v810
        %824 = vmatpush.bf16.msra.mxu0 %v809
        %825 = vmatmul.bf16.gmra.mxu0 %v379
        %v826 = vpop.f32.mrf.mxu0
        %v827 = vadd.f32 0.0, %v826
        %v828 = vpop.f32.mrf.mxu0
        %v829 = vadd.f32 0.0, %v828
        %830 = vdwg.mxu0
        %v831 = vadd.f32 %v783, %v827
        %v832 = vadd.f32 %v784, %v829
        %v833 = vld [vmem:[%s6] sm:$0x1]
        %v835 = vperm.slane %v833, 0
        %v837 = vadd.f32 %v831, %v835
        %v838 = vadd.f32 %v832, %v835
        %839 = vst [vmem:[%s305] sm:$0xff] %v837
        %840 = vst [vmem:[%s305 + $0x8] sm:$0xff] %v838
        %s841 = sand.u32 %s183, 1
        %s842 = scalar_lea.sflag [#allocation4], %s841
        %s843 = sand.u32 %s183, 1
        %s844 = smul.addr %s843, 16
        %s845 = scalar_lea.vmem [#allocation7], %s844
        // Predicated region
        $region57: #{tpu_custom_call.1} parent=47 // pred_check
          %p846 = pneg %p193
        $region58: #{tpu_custom_call.1} parent=47 // pred_check_branch
          %848 = sbr.rel (%p846) target = $region60
        $region59: #{tpu_custom_call.1} parent=47 // pred_region
          %850 = vsyncadd %s842, 0
          %s851 = smul.addr %s23, 2
          %s852 = smul.addr %s851, 8
          %s853 = scalar_lea.hbm %s7, %s852
          %s854 = sshll.u32 %s845, 4
          %s855 = int_to_ptr.vmem [resolvable:$true] %s854
          %s856 = sshll.u32 %s853, 4
          %s857 = int_to_ptr.hbm [resolvable:$true] %s856
          %862 = dma.vmem_to_hbm [thread:$0]  %s855, 256, %s857, %s842, 128, 128, 8
        $region60: #{tpu_custom_call.1} parent=47 // pred_fallthru
          _
      $region48: #{tpu_custom_call.1} parent=5 // pred_fallthru
        _
      %p863 = scmp.le.s32.totalorder 2, %s18
      // Predicated region
      $region61: #{tpu_custom_call.1} parent=5 // pred_check
        %p864 = pneg %p863
      $region62: #{tpu_custom_call.1} parent=5 // pred_check_branch
        %866 = sbr.rel (%p864) target = $region64
      $region63: #{tpu_custom_call.1} parent=5 // pred_region
        %s867 = ssub.s32 %s18, 2
        // Predicated region
        $region65: #{tpu_custom_call.1} parent=63 // pred_check
          %p868 = pneg %p199
        $region66: #{tpu_custom_call.1} parent=63 // pred_check_branch
          %870 = sbr.rel (%p868) target = $region68
        $region67: #{tpu_custom_call.1} parent=63 // pred_region
          %s871 = sand.u32 %s184, 1
          %s872 = scalar_lea.sflag [#allocation4], %s871
          %s873 = sand.u32 %s184, 1
          %s874 = smul.addr %s873, 16
          %s875 = scalar_lea.vmem [#allocation7], %s874
          %877 = dma.done %s872, 256
        $region68: #{tpu_custom_call.1} parent=63 // pred_fallthru
          _
      $region64: #{tpu_custom_call.1} parent=5 // pred_fallthru
        _
    $region6: #{tpu_custom_call.1} parent=1 // loop_footer
      %s22 = sadd.s32 1, %s18
    $region7: #{tpu_custom_call.1} parent=1 // loop_footer_branch
      %17 = sbr.rel target = $region3
    $region8: #{tpu_custom_call.1} parent=1 // loop_exit
      _
    %878 = vsyncpa [#allocation3], 1
    %s879 = scalar_lea.sflag [#allocation3], 1
    %880 = vsyncpa %s879, 1
    %881 = vsyncpa [#allocation6], 1
    %882 = vsyncpa [#allocation4], 1
    %s883 = scalar_lea.sflag [#allocation4], 1
    %884 = vsyncpa %s883, 1

</llo_original>
